<compile_context>
chip_gen: v5e
topology: v5e:2x2
jax: 0.10.0
libtpu: 0.0.40
codegen_flags: <defaults>
</compile_context>

<pallas_src>
import jax
import jax.numpy as jnp
from jax.experimental import pallas as pl
from jax.experimental.pallas import tpu as pltpu

_EPS_VAR = 1e-9     # matches torch var(...) + 1e-9 in the norm-bias
_EPS_L2 = 1e-12     # matches F.normalize default eps

# Tile targets: 256-aligned K/M for v6e/v7x MXU (use 128 on v5e).
TM_TARGET = 256
TK_TARGET = 256


def _pick_tile(dim, target):
    """Largest power-of-two-ish tile <= target that divides dim (dim itself if small)."""
    if dim <= target:
        return dim
    t = target
    while t > 1 and dim % t != 0:
        t //= 2
    return t if dim % t == 0 else dim


def _relu_norm(y, scale, offset):
    """relu -> per-row mean/var norm with learned scale/offset (single-pass variance)."""
    y = jnp.maximum(y, 0.0)
    d = y.shape[-1]
    s1 = jnp.sum(y, axis=-1, keepdims=True)
    s2 = jnp.sum(y * y, axis=-1, keepdims=True)
    mean = s1 * (1.0 / d)
    var = s2 * (1.0 / d) - mean * mean + _EPS_VAR
    inv = jax.lax.rsqrt(var)                      # EUP slot
    return (y - mean) * (inv * scale) + offset    # [rows,1]*[1,d] broadcast


# --------------------------------------------------------------------------
# Kernel: order-0 layer   out = norm(relu(x @ W + b))
# --------------------------------------------------------------------------
def _layer_o0_kernel(x_ref, w_ref, b_ref, s_ref, off_ref, o_ref):
    y = jnp.dot(x_ref[...], w_ref[...], preferred_element_type=jnp.float32)
    o_ref[...] = _relu_norm(y + b_ref[...], s_ref[...], off_ref[...])


def layer_order0(x, w, b, scale, offset):
    n, f = x.shape
    nh = w.shape[1]
    tm = _pick_tile(n, TM_TARGET)
    row = lambda v: v.reshape(1, -1)
    return pl.pallas_call(
        _layer_o0_kernel,
        out_shape=jax.ShapeDtypeStruct((n, nh), jnp.float32),
        grid_spec=pltpu.PrefetchScalarGridSpec(
            num_scalar_prefetch=0,
            grid=(n // tm,),
            in_specs=[
                pl.BlockSpec((tm, f), lambda i: (i, 0)),
                pl.BlockSpec((f, nh), lambda i: (0, 0)),
                pl.BlockSpec((1, nh), lambda i: (0, 0)),
                pl.BlockSpec((1, nh), lambda i: (0, 0)),
                pl.BlockSpec((1, nh), lambda i: (0, 0)),
            ],
            out_specs=pl.BlockSpec((tm, nh), lambda i: (i, 0)),
        ),
        compiler_params=pltpu.CompilerParams(dimension_semantics=("parallel",)),
    )(x.astype(jnp.bfloat16), w.astype(jnp.bfloat16), row(b), row(scale), row(offset))


# --------------------------------------------------------------------------
# Kernel: pre-projection  z = x @ W1  (bf16 output; feeds the spmm of hop 1)
# --------------------------------------------------------------------------
def _proj_kernel(x_ref, w_ref, o_ref):
    o_ref[...] = jnp.dot(x_ref[...], w_ref[...],
                         preferred_element_type=jnp.float32).astype(jnp.bfloat16)


# --------------------------------------------------------------------------
# Kernel: fused order-1 layer
#   acc += adj_tile @ z_tile  (K-tiled spmm, reassociated hop 1)
#   at last K-step: y0 = norm(relu(x @ W0 + b0)); y1 = norm(relu(acc + b1))
#   out tile [tm, 2*nhid] = concat(y0, y1)  -> single lane-dense store
# --------------------------------------------------------------------------
def _layer_o1_kernel(adj_ref, x_ref, z_ref, w0_ref,
                     b0_ref, s0_ref, off0_ref,
                     b1_ref, s1_ref, off1_ref,
                     o_ref, acc_ref):
    k = pl.program_id(1)

    @pl.when(k == 0)
    def _():
        acc_ref[...] = jnp.zeros_like(acc_ref)

    acc_ref[...] += jnp.dot(adj_ref[...], z_ref[...],
                            preferred_element_type=jnp.float32)

    @pl.when(k == pl.num_programs(1) - 1)
    def _():
        y0 = jnp.dot(x_ref[...], w0_ref[...], preferred_element_type=jnp.float32)
        y0 = _relu_norm(y0 + b0_ref[...], s0_ref[...], off0_ref[...])
        y1 = _relu_norm(acc_ref[...] + b1_ref[...], s1_ref[...], off1_ref[...])
        o_ref[...] = jnp.concatenate([y0, y1], axis=-1)


def layer_order1(x, adj, p0, p1):
    n, f = x.shape
    nh = p0["w"].shape[1]
    tm = _pick_tile(n, TM_TARGET)
    tk = _pick_tile(n, TK_TARGET)

    x_b = x.astype(jnp.bfloat16)
    adj_b = adj.astype(jnp.bfloat16)
    w0_b = p0["w"].astype(jnp.bfloat16)
    w1_b = p1["w"].astype(jnp.bfloat16)
    row = lambda v: v.reshape(1, -1)

    # z = x @ W1 (reassociation: spmm then runs at width nhid instead of nfeat)
    z = pl.pallas_call(
        _proj_kernel,
        out_shape=jax.ShapeDtypeStruct((n, nh), jnp.bfloat16),
        grid_spec=pltpu.PrefetchScalarGridSpec(
            num_scalar_prefetch=0,
            grid=(n // tm,),
            in_specs=[pl.BlockSpec((tm, f), lambda i: (i, 0)),
                      pl.BlockSpec((f, nh), lambda i: (0, 0))],
            out_specs=pl.BlockSpec((tm, nh), lambda i: (i, 0)),
        ),
        compiler_params=pltpu.CompilerParams(dimension_semantics=("parallel",)),
    )(x_b, w1_b)

    return pl.pallas_call(
        _layer_o1_kernel,
        out_shape=jax.ShapeDtypeStruct((n, 2 * nh), jnp.float32),
        grid_spec=pltpu.PrefetchScalarGridSpec(
            num_scalar_prefetch=0,
            grid=(n // tm, n // tk),
            in_specs=[
                pl.BlockSpec((tm, tk), lambda i, k: (i, k)),   # adj tile
                pl.BlockSpec((tm, f),  lambda i, k: (i, 0)),   # x rows (resident over k)
                pl.BlockSpec((tk, nh), lambda i, k: (k, 0)),   # z K-slice
                pl.BlockSpec((f, nh),  lambda i, k: (0, 0)),   # W0
                pl.BlockSpec((1, nh),  lambda i, k: (0, 0)),   # b0
                pl.BlockSpec((1, nh),  lambda i, k: (0, 0)),   # scale0
                pl.BlockSpec((1, nh),  lambda i, k: (0, 0)),   # offset0
                pl.BlockSpec((1, nh),  lambda i, k: (0, 0)),   # b1
                pl.BlockSpec((1, nh),  lambda i, k: (0, 0)),   # scale1
                pl.BlockSpec((1, nh),  lambda i, k: (0, 0)),   # offset1
            ],
            out_specs=pl.BlockSpec((tm, 2 * nh), lambda i, k: (i, 0)),
            scratch_shapes=[pltpu.VMEM((tm, nh), jnp.float32)],
        ),
        compiler_params=pltpu.CompilerParams(
            dimension_semantics=("parallel", "arbitrary")),
    )(adj_b, x_b, z, w0_b,
      row(p0["b"]), row(p0["scale"]), row(p0["offset"]),
      row(p1["b"]), row(p1["scale"]), row(p1["offset"]))


# --------------------------------------------------------------------------
# Kernel: output head  (L2 row-normalize via rsqrt, then linear; padded classes)
# --------------------------------------------------------------------------
def _out_head_kernel(x_ref, w_ref, b_ref, o_ref):
    x = x_ref[...]
    inv = jax.lax.rsqrt(jnp.sum(x * x, axis=-1, keepdims=True) + _EPS_L2 * _EPS_L2)
    z = (x * inv).astype(jnp.bfloat16)
    o_ref[...] = jnp.dot(z, w_ref[...], preferred_element_type=jnp.float32) + b_ref[...]


def out_head(x, w, b):
    n, d = x.shape
    c = w.shape[1]
    c_pad = max(128, ((c + 127) // 128) * 128)   # lane-dense (unmasked) output stores
    tm = _pick_tile(n, TM_TARGET)
    w_pad = jnp.zeros((d, c_pad), jnp.bfloat16).at[:, :c].set(w.astype(jnp.bfloat16))
    b_pad = jnp.zeros((1, c_pad), jnp.float32).at[0, :c].set(b)
    out = pl.pallas_call(
        _out_head_kernel,
        out_shape=jax.ShapeDtypeStruct((n, c_pad), jnp.float32),
        grid_spec=pltpu.PrefetchScalarGridSpec(
            num_scalar_prefetch=0,
            grid=(n // tm,),
            in_specs=[pl.BlockSpec((tm, d), lambda i: (i, 0)),
                      pl.BlockSpec((d, c_pad), lambda i: (0, 0)),
                      pl.BlockSpec((1, c_pad), lambda i: (0, 0))],
            out_specs=pl.BlockSpec((tm, c_pad), lambda i: (i, 0)),
        ),
        compiler_params=pltpu.CompilerParams(dimension_semantics=("parallel",)),
    )(x, w_pad, b_pad)
    return out[:, :c]


# --------------------------------------------------------------------------
# Parameter construction and forward pass
# --------------------------------------------------------------------------
def set_dims(nfeat, nhid, order_list):
    dims = []
    for i, _ in enumerate(order_list):
        if i == 0:
            dims.append((nfeat, nhid))
        elif order_list[i - 1] == 1:
            dims.append((2 * nhid, nhid))
        else:
            dims.append((nhid, nhid))
    return dims


def init_params(key, nfeat, nhid, num_classes, order_list):
    dims = set_dims(nfeat, nhid, order_list)
    params = {"gcs": []}
    for i, (din, dout) in enumerate(dims):
        order = order_list[i]
        layer = []
        for _ in range(order + 1):
            key, kw = jax.random.split(key)
            w = jax.random.normal(kw, (din, dout), jnp.float32) * (1.0 / jnp.sqrt(din))
            layer.append(dict(
                w=w,
                b=jnp.zeros((dout,), jnp.float32),
                scale=jnp.ones((dout,), jnp.float32),
                offset=jnp.zeros((dout,), jnp.float32),
            ))
        params["gcs"].append(layer)
    d_last = nhid if order_list[-1] == 0 else 2 * nhid
    key, kw, kb = jax.random.split(key, 3)
    params["w_out"] = jax.random.normal(kw, (d_last, num_classes), jnp.float32) * (1.0 / jnp.sqrt(d_last))
    params["b_out"] = jax.random.normal(kb, (num_classes,), jnp.float32) * 0.01
    return params


def graph_model_forward(params, x, adjs, order_list):
    # Dropout layers are identity in eval mode.
    for i, order in enumerate(order_list):
        layer = params["gcs"][i]
        if order == 0:
            p = layer[0]
            x = layer_order0(x, p["w"], p["b"], p["scale"], p["offset"])
        elif order == 1:
            x = layer_order1(x, adjs[i], layer[0], layer[1])
        else:
            # TODO(synk): GraphModel.set_dims/gc_out only distinguish orders 0/1;
            #             order > 1 would need a chained-hop kernel variant.
            raise NotImplementedError("order > 1 not supported")
    return out_head(x, params["w_out"], params["b_out"])


# Pure-JAX f32 reference (non-reassociated, no Pallas) for correctness check.
def reference_forward(params, x, adjs, order_list):
    for i, order in enumerate(order_list):
        layer = params["gcs"][i]
        hop = x
        outs = []
        for o in range(order + 1):
            if o > 0:
                hop = adjs[i] @ hop
            p = layer[o]
            y = jnp.maximum(hop @ p["w"] + p["b"][None, :], 0.0)
            mean = jnp.mean(y, axis=1, keepdims=True)
            var = jnp.mean((y - mean) ** 2, axis=1, keepdims=True) + _EPS_VAR
            outs.append((y - mean) * p["scale"][None, :] * jax.lax.rsqrt(var)
                        + p["offset"][None, :])
        x = outs[0] if order == 0 else jnp.concatenate(outs, axis=1)
    nrm = jnp.sqrt(jnp.sum(x * x, axis=1, keepdims=True))
    z = x / jnp.maximum(nrm, _EPS_L2)
    return z @ params["w_out"] + params["b_out"][None, :]


if __name__ == "__main__":
    key = jax.random.PRNGKey(0)
    # Small but tiling-exercising shapes: grid = (2, 2) on the fused order-1 layer.
    N, nfeat, nhid, num_classes = 512, 64, 64, 16
    order_list = [1, 0]   # layers = 2; gc_out input dim = nhid (last order == 0)

    k_x, k_adj, k_par = jax.random.split(key, 3)
    x = jax.random.normal(k_x, (N, nfeat), jnp.float32)

    adjs = []
    ka = k_adj
    for _ in order_list:
        ka, k = jax.random.split(ka)
        a = jax.random.uniform(k, (N, N), jnp.float32)
        a = a / jnp.sum(a, axis=1, keepdims=True)   # row-normalized dense adjacency
        adjs.append(a)

    params = init_params(k_par, nfeat, nhid, num_classes, order_list)

    out = graph_model_forward(params, x, adjs, order_list)
    out = jax.block_until_ready(out)

    ref = reference_forward(params, x, adjs, order_list)
    assert out.shape == (N, num_classes), out.shape
    assert bool(jnp.all(jnp.isfinite(out)))
    # bf16 MXU operands vs f32 reference -> relaxed tolerance.
    assert bool(jnp.allclose(out, ref, atol=5e-2, rtol=5e-2)), "mismatch vs reference"

    print("KERNEL_OK")
</pallas_src>

<mosaic_0001>
module attributes {stable_mosaic.version = 11 : i64} {
  func.func @_proj_kernel(%arg0: i32, %arg1: memref<256x64xbf16, #tpu.memory_space<vmem>>, %arg2: memref<64x64xbf16, #tpu.memory_space<vmem>>, %arg3: memref<256x64xbf16, #tpu.memory_space<vmem>>) attributes {dimension_semantics = [#tpu.dimension_semantics<parallel>], iteration_bounds = array<i64: 2>, scalar_prefetch = 0 : i64, scratch_operands = 0 : i64, tpu.core_type = #tpu.core_type<tc>, window_params = [{transform_indices = @transform_0, window_bounds = array<i64: 256, 64>}, {pipeline_mode = #tpu.pipeline_mode<synchronous>, transform_indices = @transform_1, window_bounds = array<i64: 64, 64>}, {transform_indices = @transform_2, window_bounds = array<i64: 256, 64>}]} {
    %c0 = arith.constant 0 : index
    %c0_0 = arith.constant 0 : index
    %0 = vector.load %arg1[%c0, %c0_0] : memref<256x64xbf16, #tpu.memory_space<vmem>>, vector<256x64xbf16>
    %c0_1 = arith.constant 0 : index
    %c0_2 = arith.constant 0 : index
    %1 = vector.load %arg2[%c0_1, %c0_2] : memref<64x64xbf16, #tpu.memory_space<vmem>>, vector<64x64xbf16>
    %cst = arith.constant dense<0.000000e+00> : vector<256x64xf32>
    %2 = tpu.matmul %0, %1, %cst {dimension_numbers = #tpu.dot_dimension_numbers<[1], [0], [0], [1], [0, 0, 1, 1], [], []>} : vector<256x64xbf16>, vector<64x64xbf16>, vector<256x64xf32> -> vector<256x64xf32>
    %3 = arith.truncf %2 : vector<256x64xf32> to vector<256x64xbf16>
    %c0_3 = arith.constant 0 : index
    %c0_4 = arith.constant 0 : index
    %4 = vector.load %arg3[%c0_3, %c0_4] : memref<256x64xbf16, #tpu.memory_space<vmem>>, vector<256x64xbf16>
    tpu.vector_store %arg3[%c0_3, %c0_4], %3 {strides = array<i32>} : memref<256x64xbf16, #tpu.memory_space<vmem>>, vector<256x64xbf16>,
    return
  }
  func.func @transform_0(%arg0: i32) -> (i32, i32) {
    %c0_i32 = arith.constant 0 : i32
    %c0_i32_0 = arith.constant 0 : i32
    return %arg0, %c0_i32 : i32, i32
  }
  func.func @transform_1(%arg0: i32) -> (i32, i32) {
    %c0_i32 = arith.constant 0 : i32
    %c0_i32_0 = arith.constant 0 : i32
    %c0_i32_1 = arith.constant 0 : i32
    return %c0_i32, %c0_i32_0 : i32, i32
  }
  func.func @transform_2(%arg0: i32) -> (i32, i32) {
    %c0_i32 = arith.constant 0 : i32
    %c0_i32_0 = arith.constant 0 : i32
    return %arg0, %c0_i32 : i32, i32
  }
}

</mosaic_0001>

<llo_original>
// kernel: tpu_custom_call.1
$region0: #{tpu_custom_call.1}
  #allocation0 [shape = 'u32[]', space=smem, size = 0x4, offset = 0x4, fixed_abs, tag = 'smem constant byte address 0x4 - core index']
  #allocation1 [shape = 'u32[72,128]{1,0:T(1,128)}', space=vmem, size = 0x9000, scoped, tag = 'internal scratch']
  %s0 = inlined_call_operand.vmem [shape: bf16[512,64], index: 0, kind: input, shape index: {}]
  %s1 = inlined_call_operand.vmem [shape: bf16[64,64], index: 1, kind: input, shape index: {}]
  %s2 = inlined_call_operand.vmem [shape: bf16[512,64], index: 2, kind: output, shape index: {}]
  %s3 = sld [smem:[#allocation0]]
  $region41: #{tpu_custom_call.1} parent=0
    _
  %s5 = ssub.s32 1, %s3
  %s6 = scalar_select 0, %s5, %s3
  loop: start=0, step=1, limit=4
  $region2: #{tpu_custom_call.1} parent=0 // loop_pre_header
    _
  $region3: #{tpu_custom_call.1} parent=0 // loop_header
    %s8 = sphi 0, %s12
    %p9 = scmp.ge.s32.totalorder %s8, 4
    %s18 = sphi 0, %s20
    %s21 = sphi 0, %s18
    %s22 = sphi 0, %s21
    %s38 = sphi 0, %s22
    %s42 = sphi 0, %s42
    %s44 = sphi 0, %s42
    %s45 = sphi 0, %s44
    %s59 = sphi 0, %s45
    %s65 = sphi 0, %s67
    %s68 = sphi 0, %s65
    %s69 = sphi 0, %s68
    %s85 = sphi 0, %s69
  $region4: #{tpu_custom_call.1} parent=0 // loop_header_branch
    %11 = sbr.rel (%p9) target = $region8
  $region5: #{tpu_custom_call.1} parent=0 // loop_body
    %s13 = ssub.s32 %s8, 1
    %s14 = ssub.s32 %s8, 2
    %s15 = sadd.s32 %s8, 1
    %s16 = ssub.s32 %s8, %s15
    %p17 = scmp.eq.s32.totalorder %s16, 0
    %s19 = sadd.s32 %s18, 1
    %s20 = scalar_select %p17, %s18, %s19
    %p23 = pneg %p17
    %p24 = scmp.eq.s32.totalorder %s8, 1
    %p25 = por %p23, %p24
    %p26 = scmp.ne.s32.totalorder %s18, %s21
    %p27 = scmp.eq.s32.totalorder %s8, 0
    %p28 = por %p26, %p27
    %p29 = scmp.ne.s32.totalorder %s18, %s21
    %p30 = scmp.eq.s32.totalorder %s13, 1
    %p31 = por %p29, %p30
    %p32 = scmp.ne.s32.totalorder %s21, %s22
    %p33 = scmp.eq.s32.totalorder %s13, 0
    %p34 = por %p32, %p33
    %p35 = scmp.ne.s32.totalorder %s21, %s22
    %p36 = scmp.eq.s32.totalorder %s14, 1
    %p37 = por %p35, %p36
    %p39 = scmp.ne.s32.totalorder %s22, %s38
    %p40 = scmp.eq.s32.totalorder %s14, 0
    %p41 = por %p39, %p40
    %s43 = sadd.s32 %s42, 1
    %p46 = scmp.eq.s32.totalorder %s8, 1
    %p47 = scmp.ne.s32.totalorder %s42, %s44
    %p48 = scmp.eq.s32.totalorder %s8, 0
    %p49 = por %p47, %p48
    %p50 = scmp.ne.s32.totalorder %s42, %s44
    %p51 = scmp.eq.s32.totalorder %s13, 1
    %p52 = por %p50, %p51
    %p53 = scmp.ne.s32.totalorder %s44, %s45
    %p54 = scmp.eq.s32.totalorder %s13, 0
    %p55 = por %p53, %p54
    %p56 = scmp.ne.s32.totalorder %s44, %s45
    %p57 = scmp.eq.s32.totalorder %s14, 1
    %p58 = por %p56, %p57
    %p60 = scmp.ne.s32.totalorder %s45, %s59
    %p61 = scmp.eq.s32.totalorder %s14, 0
    %p62 = por %p60, %p61
    %s63 = ssub.s32 %s8, %s15
    %p64 = scmp.eq.s32.totalorder %s63, 0
    %s66 = sadd.s32 %s65, 1
    %s67 = scalar_select %p64, %s65, %s66
    %p70 = pneg %p64
    %p71 = scmp.eq.s32.totalorder %s8, 1
    %p72 = por %p70, %p71
    %p73 = scmp.ne.s32.totalorder %s65, %s68
    %p74 = scmp.eq.s32.totalorder %s8, 0
    %p75 = por %p73, %p74
    %p76 = scmp.ne.s32.totalorder %s65, %s68
    %p77 = scmp.eq.s32.totalorder %s13, 1
    %p78 = por %p76, %p77
    %p79 = scmp.ne.s32.totalorder %s68, %s69
    %p80 = scmp.eq.s32.totalorder %s13, 0
    %p81 = por %p79, %p80
    %p82 = scmp.ne.s32.totalorder %s68, %s69
    %p83 = scmp.eq.s32.totalorder %s14, 1
    %p84 = por %p82, %p83
    %p86 = scmp.ne.s32.totalorder %s69, %s85
    %p87 = scmp.eq.s32.totalorder %s14, 0
    %p88 = por %p86, %p87
    %p89 = scmp.le.s32.totalorder 1, %s8
    %p90 = scmp.lt.s32.totalorder %s8, 3
    %p91 = pnand %p89, %p90
    %p92 = pneg %p91
    // Predicated region
    $region9: #{tpu_custom_call.1} parent=5 // pred_check
      _
    $region10: #{tpu_custom_call.1} parent=5 // pred_check_branch
      %94 = sbr.rel (%p91) target = $region12
    $region11: #{tpu_custom_call.1} parent=5 // pred_region
      %s95 = ssub.s32 %s8, 1
      // Predicated region
      $region13: #{tpu_custom_call.1} parent=11 // pred_check
        %p96 = pneg %p55
      $region14: #{tpu_custom_call.1} parent=11 // pred_check_branch
        %98 = sbr.rel (%p96) target = $region16
      $region15: #{tpu_custom_call.1} parent=11 // pred_region
        _
      $region16: #{tpu_custom_call.1} parent=11 // pred_fallthru
        _
    $region12: #{tpu_custom_call.1} parent=5 // pred_fallthru
      _
    %p99 = scmp.lt.s32.totalorder %s8, 2
    // Predicated region
    $region17: #{tpu_custom_call.1} parent=5 // pred_check
      %p100 = pneg %p99
    $region18: #{tpu_custom_call.1} parent=5 // pred_check_branch
      %102 = sbr.rel (%p100) target = $region20
    $region19: #{tpu_custom_call.1} parent=5 // pred_region
      // Predicated region
      $region21: #{tpu_custom_call.1} parent=19 // pred_check
        %p103 = pneg %p28
      $region22: #{tpu_custom_call.1} parent=19 // pred_check_branch
        %105 = sbr.rel (%p103) target = $region24
      $region23: #{tpu_custom_call.1} parent=19 // pred_region
        %s106 = smul.u32 32, %s8
        %p107 = scmp.lt.s32.totalorder %s106, 63
        %s108 = scalar_select %p107, %s106, 63
        %s109 = smul.addr %s108, 4
        %s110 = scalar_lea.vmem %s0, %s109
        %s111 = smul.u32 32, %s8
      $region24: #{tpu_custom_call.1} parent=19 // pred_fallthru
        _
    $region20: #{tpu_custom_call.1} parent=5 // pred_fallthru
      _
    %p112 = scmp.le.s32.totalorder 1, %s8
    %p113 = scmp.lt.s32.totalorder %s8, 3
    %p114 = pnand %p112, %p113
    %p115 = pneg %p114
    // Predicated region
    $region25: #{tpu_custom_call.1} parent=5 // pred_check
      _
    $region26: #{tpu_custom_call.1} parent=5 // pred_check_branch
      %117 = sbr.rel (%p114) target = $region28
    $region27: #{tpu_custom_call.1} parent=5 // pred_region
      %s118 = ssub.s32 %s8, 1
      %s119 = smul.u32 32, %s13
      %p120 = scmp.lt.s32.totalorder %s119, 63
      %s121 = scalar_select %p120, %s119, 63
      %s122 = smul.addr %s121, 4
      %s123 = scalar_lea.vmem %s0, %s122
      %p124 = pneg %p34
      %p125 = pneg %p31
      %p126 = pneg %p55
      %p127 = pneg %p52
      %p128 = pneg %p81
      %p129 = pneg %p78
      %s130 = smul.u32 32, %s13
      %p131 = scmp.lt.s32.totalorder %s130, 63
      %s132 = scalar_select %p131, %s130, 63
      %s133 = smul.addr %s132, 4
      %s134 = scalar_lea.vmem %s2, %s133
      %s135 = smul.u32 32, %s13
      %p136 = scmp.lt.s32.totalorder %s135, 63
      %s137 = scalar_select %p136, %s135, 63
      %s138 = smul.addr %s137, 4
      %s139 = scalar_lea.vmem %s0, %s138
      %s140 = smul.u32 32, %s13
      %s141 = smul.u32 32, %s13
      %p142 = scmp.lt.s32.totalorder %s141, 63
      %s143 = scalar_select %p142, %s141, 63
      %s144 = smul.addr %s143, 4
      %s145 = scalar_lea.vmem %s2, %s144
      %s146 = smul.u32 32, %s13
      %v148 = vld [vmem:[%s139] sm:$0xf]
      %v149 = vld [vmem:[%s139 + $0x4] sm:$0xf]
      %v150 = vld [vmem:[%s139 + $0x8] sm:$0xf]
      %v151 = vld [vmem:[%s139 + $0xc] sm:$0xf]
      %v152 = vld [vmem:[%s139 + $0x10] sm:$0xf]
      %v153 = vld [vmem:[%s139 + $0x14] sm:$0xf]
      %v154 = vld [vmem:[%s139 + $0x18] sm:$0xf]
      %v155 = vld [vmem:[%s139 + $0x1c] sm:$0xf]
      %v156 = vld [vmem:[%s139 + $0x20] sm:$0xf]
      %v157 = vld [vmem:[%s139 + $0x24] sm:$0xf]
      %v158 = vld [vmem:[%s139 + $0x28] sm:$0xf]
      %v159 = vld [vmem:[%s139 + $0x2c] sm:$0xf]
      %v160 = vld [vmem:[%s139 + $0x30] sm:$0xf]
      %v161 = vld [vmem:[%s139 + $0x34] sm:$0xf]
      %v162 = vld [vmem:[%s139 + $0x38] sm:$0xf]
      %v163 = vld [vmem:[%s139 + $0x3c] sm:$0xf]
      %v164 = vld [vmem:[%s139 + $0x40] sm:$0xf]
      %v165 = vld [vmem:[%s139 + $0x44] sm:$0xf]
      %v166 = vld [vmem:[%s139 + $0x48] sm:$0xf]
      %v167 = vld [vmem:[%s139 + $0x4c] sm:$0xf]
      %v168 = vld [vmem:[%s139 + $0x50] sm:$0xf]
      %v169 = vld [vmem:[%s139 + $0x54] sm:$0xf]
      %v170 = vld [vmem:[%s139 + $0x58] sm:$0xf]
      %v171 = vld [vmem:[%s139 + $0x5c] sm:$0xf]
      %v172 = vld [vmem:[%s139 + $0x60] sm:$0xf]
      %v173 = vld [vmem:[%s139 + $0x64] sm:$0xf]
      %v174 = vld [vmem:[%s139 + $0x68] sm:$0xf]
      %v175 = vld [vmem:[%s139 + $0x6c] sm:$0xf]
      %v176 = vld [vmem:[%s139 + $0x70] sm:$0xf]
      %v177 = vld [vmem:[%s139 + $0x74] sm:$0xf]
      %v178 = vld [vmem:[%s139 + $0x78] sm:$0xf]
      %v179 = vld [vmem:[%s139 + $0x7c] sm:$0xf]
      %v180 = vld [vmem:[%s1] sm:$0xf]
      %v181 = vld [vmem:[%s1 + $0x4] sm:$0xf]
      %v182 = vld [vmem:[%s1 + $0x8] sm:$0xf]
      %v183 = vld [vmem:[%s1 + $0xc] sm:$0xf]
      %v184 = vld [vmem:[%s1 + $0x10] sm:$0xf]
      %v185 = vld [vmem:[%s1 + $0x14] sm:$0xf]
      %v186 = vld [vmem:[%s1 + $0x18] sm:$0xf]
      %v187 = vld [vmem:[%s1 + $0x1c] sm:$0xf]
      %v220 = vunpack.c.l.b16 %v148
      %v221 = vunpack.c.l.b16 %v149
      %v222 = vunpack.c.l.b16 %v150
      %v223 = vunpack.c.l.b16 %v151
      %v224 = vunpack.c.l.b16 %v152
      %v225 = vunpack.c.l.b16 %v153
      %v226 = vunpack.c.l.b16 %v154
      %v227 = vunpack.c.l.b16 %v155
      %v228 = vunpack.c.l.b16 %v156
      %v229 = vunpack.c.l.b16 %v157
      %v230 = vunpack.c.l.b16 %v158
      %v231 = vunpack.c.l.b16 %v159
      %v232 = vunpack.c.l.b16 %v160
      %v233 = vunpack.c.l.b16 %v161
      %v234 = vunpack.c.l.b16 %v162
      %v235 = vunpack.c.l.b16 %v163
      %v236 = vunpack.c.l.b16 %v164
      %v237 = vunpack.c.l.b16 %v165
      %v238 = vunpack.c.l.b16 %v166
      %v239 = vunpack.c.l.b16 %v167
      %v240 = vunpack.c.l.b16 %v168
      %v241 = vunpack.c.l.b16 %v169
      %v242 = vunpack.c.l.b16 %v170
      %v243 = vunpack.c.l.b16 %v171
      %v244 = vunpack.c.l.b16 %v172
      %v245 = vunpack.c.l.b16 %v173
      %v246 = vunpack.c.l.b16 %v174
      %v247 = vunpack.c.l.b16 %v175
      %v248 = vunpack.c.l.b16 %v176
      %v249 = vunpack.c.l.b16 %v177
      %v250 = vunpack.c.l.b16 %v178
      %v251 = vunpack.c.l.b16 %v179
      %v252 = vpack.c.b16 %v221, %v220
      %v253 = vpack.c.b16 %v223, %v222
      %v254 = vpack.c.b16 %v225, %v224
      %v255 = vpack.c.b16 %v227, %v226
      %v256 = vpack.c.b16 %v229, %v228
      %v257 = vpack.c.b16 %v231, %v230
      %v258 = vpack.c.b16 %v233, %v232
      %v259 = vpack.c.b16 %v235, %v234
      %v260 = vpack.c.b16 %v237, %v236
      %v261 = vpack.c.b16 %v239, %v238
      %v262 = vpack.c.b16 %v241, %v240
      %v263 = vpack.c.b16 %v243, %v242
      %v264 = vpack.c.b16 %v245, %v244
      %v265 = vpack.c.b16 %v247, %v246
      %v266 = vpack.c.b16 %v249, %v248
      %v267 = vpack.c.b16 %v251, %v250
      %v276 = vunpack.c.l.b16 %v180
      %v277 = vunpack.c.l.b16 %v181
      %v278 = vunpack.c.l.b16 %v182
      %v279 = vunpack.c.l.b16 %v183
      %v280 = vunpack.c.l.b16 %v184
      %v281 = vunpack.c.l.b16 %v185
      %v282 = vunpack.c.l.b16 %v186
      %v283 = vunpack.c.l.b16 %v187
      %v284 = vpack.c.b16 %v277, %v276
      %v285 = vpack.c.b16 %v279, %v278
      %v286 = vpack.c.b16 %v281, %v280
      %v287 = vpack.c.b16 %v283, %v282
      %vm292 = vcmask 523264
      %v294 = vsel %vm292, %v252, 0
      %v297 = vsel %vm292, %v253, 0
      %v300 = vsel %vm292, %v254, 0
      %v303 = vsel %vm292, %v255, 0
      %v306 = vsel %vm292, %v256, 0
      %v309 = vsel %vm292, %v257, 0
      %v312 = vsel %vm292, %v258, 0
      %v315 = vsel %vm292, %v259, 0
      %v318 = vsel %vm292, %v260, 0
      %v321 = vsel %vm292, %v261, 0
      %v324 = vsel %vm292, %v262, 0
      %v327 = vsel %vm292, %v263, 0
      %v330 = vsel %vm292, %v264, 0
      %v333 = vsel %vm292, %v265, 0
      %v336 = vsel %vm292, %v266, 0
      %v339 = vsel %vm292, %v267, 0
      %341 = vmatpush.bf16.msra.mxu0 0
      %342 = vmatpush.bf16.msra.mxu0 0
      %343 = vmatpush.bf16.msra.mxu0 0
      %344 = vmatpush.bf16.msra.mxu0 0
      %345 = vmatpush.bf16.msra.mxu0 %v287
      %346 = vmatpush.bf16.msra.mxu0 %v286
      %347 = vmatpush.bf16.msra.mxu0 %v285
      %348 = vmatpush.bf16.msra.mxu0 %v284
      %349 = vmatmul.bf16.gmra.mxu0 %v294
      %v350 = vpop.f32.mrf.mxu0
      %v351 = vadd.f32 0.0, %v350
      %v352 = vpop.f32.mrf.mxu0
      %v353 = vadd.f32 0.0, %v352
      %354 = vmatmul.bf16.gmra.mxu0 %v297
      %v355 = vpop.f32.mrf.mxu0
      %v356 = vadd.f32 0.0, %v355
      %v357 = vpop.f32.mrf.mxu0
      %v358 = vadd.f32 0.0, %v357
      %359 = vmatmul.bf16.gmra.mxu0 %v300
      %v360 = vpop.f32.mrf.mxu0
      %v361 = vadd.f32 0.0, %v360
      %v362 = vpop.f32.mrf.mxu0
      %v363 = vadd.f32 0.0, %v362
      %364 = vmatmul.bf16.gmra.mxu0 %v303
      %v365 = vpop.f32.mrf.mxu0
      %v366 = vadd.f32 0.0, %v365
      %v367 = vpop.f32.mrf.mxu0
      %v368 = vadd.f32 0.0, %v367
      %369 = vmatmul.bf16.gmra.mxu0 %v306
      %v370 = vpop.f32.mrf.mxu0
      %v371 = vadd.f32 0.0, %v370
      %v372 = vpop.f32.mrf.mxu0
      %v373 = vadd.f32 0.0, %v372
      %374 = vmatmul.bf16.gmra.mxu0 %v309
      %v375 = vpop.f32.mrf.mxu0
      %v376 = vadd.f32 0.0, %v375
      %v377 = vpop.f32.mrf.mxu0
      %v378 = vadd.f32 0.0, %v377
      %379 = vmatmul.bf16.gmra.mxu0 %v312
      %v380 = vpop.f32.mrf.mxu0
      %v381 = vadd.f32 0.0, %v380
      %v382 = vpop.f32.mrf.mxu0
      %v383 = vadd.f32 0.0, %v382
      %384 = vmatmul.bf16.gmra.mxu0 %v315
      %v385 = vpop.f32.mrf.mxu0
      %v386 = vadd.f32 0.0, %v385
      %v387 = vpop.f32.mrf.mxu0
      %v388 = vadd.f32 0.0, %v387
      %389 = vmatmul.bf16.gmra.mxu0 %v318
      %v390 = vpop.f32.mrf.mxu0
      %v391 = vadd.f32 0.0, %v390
      %v392 = vpop.f32.mrf.mxu0
      %v393 = vadd.f32 0.0, %v392
      %394 = vmatmul.bf16.gmra.mxu0 %v321
      %v395 = vpop.f32.mrf.mxu0
      %v396 = vadd.f32 0.0, %v395
      %v397 = vpop.f32.mrf.mxu0
      %v398 = vadd.f32 0.0, %v397
      %399 = vmatmul.bf16.gmra.mxu0 %v324
      %v400 = vpop.f32.mrf.mxu0
      %v401 = vadd.f32 0.0, %v400
      %v402 = vpop.f32.mrf.mxu0
      %v403 = vadd.f32 0.0, %v402
      %404 = vmatmul.bf16.gmra.mxu0 %v327
      %v405 = vpop.f32.mrf.mxu0
      %v406 = vadd.f32 0.0, %v405
      %v407 = vpop.f32.mrf.mxu0
      %v408 = vadd.f32 0.0, %v407
      %409 = vmatmul.bf16.gmra.mxu0 %v330
      %v410 = vpop.f32.mrf.mxu0
      %v411 = vadd.f32 0.0, %v410
      %v412 = vpop.f32.mrf.mxu0
      %v413 = vadd.f32 0.0, %v412
      %414 = vmatmul.bf16.gmra.mxu0 %v333
      %v415 = vpop.f32.mrf.mxu0
      %v416 = vadd.f32 0.0, %v415
      %v417 = vpop.f32.mrf.mxu0
      %v418 = vadd.f32 0.0, %v417
      %419 = vmatmul.bf16.gmra.mxu0 %v336
      %v420 = vpop.f32.mrf.mxu0
      %v421 = vadd.f32 0.0, %v420
      %v422 = vpop.f32.mrf.mxu0
      %v423 = vadd.f32 0.0, %v422
      %424 = vmatmul.bf16.gmra.mxu0 %v339
      %v425 = vpop.f32.mrf.mxu0
      %v426 = vadd.f32 0.0, %v425
      %v427 = vpop.f32.mrf.mxu0
      %v428 = vadd.f32 0.0, %v427
      %429 = vdwg.mxu0
      %v430 = vpack.c.bf16 %v351, %v351
      %v431 = vpack.c.bf16 %v353, %v353
      %v432 = vpack.c.bf16 %v356, %v356
      %v433 = vpack.c.bf16 %v358, %v358
      %v434 = vpack.c.bf16 %v361, %v361
      %v435 = vpack.c.bf16 %v363, %v363
      %v436 = vpack.c.bf16 %v366, %v366
      %v437 = vpack.c.bf16 %v368, %v368
      %v438 = vpack.c.bf16 %v371, %v371
      %v439 = vpack.c.bf16 %v373, %v373
      %v440 = vpack.c.bf16 %v376, %v376
      %v441 = vpack.c.bf16 %v378, %v378
      %v442 = vpack.c.bf16 %v381, %v381
      %v443 = vpack.c.bf16 %v383, %v383
      %v444 = vpack.c.bf16 %v386, %v386
      %v445 = vpack.c.bf16 %v388, %v388
      %v446 = vpack.c.bf16 %v391, %v391
      %v447 = vpack.c.bf16 %v393, %v393
      %v448 = vpack.c.bf16 %v396, %v396
      %v449 = vpack.c.bf16 %v398, %v398
      %v450 = vpack.c.bf16 %v401, %v401
      %v451 = vpack.c.bf16 %v403, %v403
      %v452 = vpack.c.bf16 %v406, %v406
      %v453 = vpack.c.bf16 %v408, %v408
      %v454 = vpack.c.bf16 %v411, %v411
      %v455 = vpack.c.bf16 %v413, %v413
      %v456 = vpack.c.bf16 %v416, %v416
      %v457 = vpack.c.bf16 %v418, %v418
      %v458 = vpack.c.bf16 %v421, %v421
      %v459 = vpack.c.bf16 %v423, %v423
      %v460 = vpack.c.bf16 %v426, %v426
      %v461 = vpack.c.bf16 %v428, %v428
      %vm462 = vcmask 519168
      %463 = vst.msk [vmem:[%s145] sm:$0xf] %vm462, %v430
      %464 = vst.msk [vmem:[%s145 + $0x4] sm:$0xf] %vm462, %v431
      %465 = vst.msk [vmem:[%s145 + $0x8] sm:$0xf] %vm462, %v432
      %466 = vst.msk [vmem:[%s145 + $0xc] sm:$0xf] %vm462, %v433
      %467 = vst.msk [vmem:[%s145 + $0x10] sm:$0xf] %vm462, %v434
      %468 = vst.msk [vmem:[%s145 + $0x14] sm:$0xf] %vm462, %v435
      %469 = vst.msk [vmem:[%s145 + $0x18] sm:$0xf] %vm462, %v436
      %470 = vst.msk [vmem:[%s145 + $0x1c] sm:$0xf] %vm462, %v437
      %471 = vst.msk [vmem:[%s145 + $0x20] sm:$0xf] %vm462, %v438
      %472 = vst.msk [vmem:[%s145 + $0x24] sm:$0xf] %vm462, %v439
      %473 = vst.msk [vmem:[%s145 + $0x28] sm:$0xf] %vm462, %v440
      %474 = vst.msk [vmem:[%s145 + $0x2c] sm:$0xf] %vm462, %v441
      %475 = vst.msk [vmem:[%s145 + $0x30] sm:$0xf] %vm462, %v442
      %476 = vst.msk [vmem:[%s145 + $0x34] sm:$0xf] %vm462, %v443
      %477 = vst.msk [vmem:[%s145 + $0x38] sm:$0xf] %vm462, %v444
      %478 = vst.msk [vmem:[%s145 + $0x3c] sm:$0xf] %vm462, %v445
      %479 = vst.msk [vmem:[%s145 + $0x40] sm:$0xf] %vm462, %v446
      %480 = vst.msk [vmem:[%s145 + $0x44] sm:$0xf] %vm462, %v447
      %481 = vst.msk [vmem:[%s145 + $0x48] sm:$0xf] %vm462, %v448
      %482 = vst.msk [vmem:[%s145 + $0x4c] sm:$0xf] %vm462, %v449
      %483 = vst.msk [vmem:[%s145 + $0x50] sm:$0xf] %vm462, %v450
      %484 = vst.msk [vmem:[%s145 + $0x54] sm:$0xf] %vm462, %v451
      %485 = vst.msk [vmem:[%s145 + $0x58] sm:$0xf] %vm462, %v452
      %486 = vst.msk [vmem:[%s145 + $0x5c] sm:$0xf] %vm462, %v453
      %487 = vst.msk [vmem:[%s145 + $0x60] sm:$0xf] %vm462, %v454
      %488 = vst.msk [vmem:[%s145 + $0x64] sm:$0xf] %vm462, %v455
      %489 = vst.msk [vmem:[%s145 + $0x68] sm:$0xf] %vm462, %v456
      %490 = vst.msk [vmem:[%s145 + $0x6c] sm:$0xf] %vm462, %v457
      %491 = vst.msk [vmem:[%s145 + $0x70] sm:$0xf] %vm462, %v458
      %492 = vst.msk [vmem:[%s145 + $0x74] sm:$0xf] %vm462, %v459
      %493 = vst.msk [vmem:[%s145 + $0x78] sm:$0xf] %vm462, %v460
      %494 = vst.msk [vmem:[%s145 + $0x7c] sm:$0xf] %vm462, %v461
      %s495 = smul.u32 32, %s13
      %p496 = scmp.lt.s32.totalorder %s495, 63
      %s497 = scalar_select %p496, %s495, 63
      %s498 = smul.addr %s497, 4
      %s499 = scalar_lea.vmem %s2, %s498
      // Predicated region
      $region29: #{tpu_custom_call.1} parent=27 // pred_check
        %p500 = pneg %p78
      $region30: #{tpu_custom_call.1} parent=27 // pred_check_branch
        %502 = sbr.rel (%p500) target = $region32
      $region31: #{tpu_custom_call.1} parent=27 // pred_region
        %s503 = smul.u32 32, %s13
      $region32: #{tpu_custom_call.1} parent=27 // pred_fallthru
        _
    $region28: #{tpu_custom_call.1} parent=5 // pred_fallthru
      _
    %p504 = scmp.le.s32.totalorder 2, %s8
    // Predicated region
    $region33: #{tpu_custom_call.1} parent=5 // pred_check
      %p505 = pneg %p504
    $region34: #{tpu_custom_call.1} parent=5 // pred_check_branch
      %507 = sbr.rel (%p505) target = $region36
    $region35: #{tpu_custom_call.1} parent=5 // pred_region
      %s508 = ssub.s32 %s8, 2
      // Predicated region
      $region37: #{tpu_custom_call.1} parent=35 // pred_check
        %p509 = pneg %p84
      $region38: #{tpu_custom_call.1} parent=35 // pred_check_branch
        %511 = sbr.rel (%p509) target = $region40
      $region39: #{tpu_custom_call.1} parent=35 // pred_region
        %s512 = smul.u32 32, %s14
        %p513 = scmp.lt.s32.totalorder %s512, 63
        %s514 = scalar_select %p513, %s512, 63
        %s515 = smul.addr %s514, 4
        %s516 = scalar_lea.vmem %s2, %s515
      $region40: #{tpu_custom_call.1} parent=35 // pred_fallthru
        _
    $region36: #{tpu_custom_call.1} parent=5 // pred_fallthru
      _
  $region6: #{tpu_custom_call.1} parent=0 // loop_footer
    %s12 = sadd.s32 1, %s8
  $region7: #{tpu_custom_call.1} parent=0 // loop_footer_branch
    %7 = sbr.rel target = $region3
  $region8: #{tpu_custom_call.1} parent=0 // loop_exit
    _

</llo_original>
